<compile_context>
chip_gen: v7x
topology: tpu7x:2x2x1
jax: 0.10.0
libtpu: 0.0.40
codegen_flags: <defaults>
</compile_context>

<pallas_src>
import functools

import jax
import jax.numpy as jnp
from jax.experimental import pallas as pl
from jax.experimental.pallas import tpu as pltpu


_VMEM_LIMIT = 64 * 1024 * 1024   # safe on v5e/v6e (128 MiB phys) and v7x (64 MiB phys)
_EPS = 1e-5


def _pick_row_tile(n, cap=512):
    """Token-tile size: full array if small, else a multiple of 8 dividing n."""
    if n <= cap:
        return n
    for t in range(cap, 7, -8):
        if n % t == 0:
            return t
    return cap


# ---------------------------------------------------------------------------
# Kernel 1: proj_dec (d_encoder -> d_model) fused with cls-token concat
# ---------------------------------------------------------------------------

def _proj_dec_kernel(x_ref, w_ref, b_ref, cls_ref, o_ref):
    # x_ref: (1, Np, K)  w_ref: (K, D) bf16  b_ref: (1, D)  cls_ref: (1, n_cls, D)
    # o_ref: (1, Np + n_cls, D)
    y = jnp.dot(x_ref[0].astype(jnp.bfloat16), w_ref[...],
                preferred_element_type=jnp.float32) + b_ref[...]
    np_rows = y.shape[0]
    o_ref[0, :np_rows, :] = y.astype(o_ref.dtype)
    o_ref[0, np_rows:, :] = cls_ref[0].astype(o_ref.dtype)


def proj_dec_concat(x, w, b, cls_emb):
    B, Np, K = x.shape
    D = w.shape[1]
    n_cls = cls_emb.shape[1]
    Ntot = Np + n_cls
    return pl.pallas_call(
        _proj_dec_kernel,
        out_shape=jax.ShapeDtypeStruct((B, Ntot, D), jnp.float32),
        grid=(B,),
        in_specs=[
            pl.BlockSpec((1, Np, K), lambda i: (i, 0, 0)),
            pl.BlockSpec((K, D), lambda i: (0, 0)),
            pl.BlockSpec((1, D), lambda i: (0, 0)),
            pl.BlockSpec((1, n_cls, D), lambda i: (0, 0, 0)),
        ],
        out_specs=pl.BlockSpec((1, Ntot, D), lambda i: (i, 0, 0)),
        compiler_params=pltpu.CompilerParams(
            dimension_semantics=("parallel",), vmem_limit_bytes=_VMEM_LIMIT),
    )(x, w, b.reshape(1, D), cls_emb)


# ---------------------------------------------------------------------------
# Kernel 2: fused LN1 + QKV + multi-head attention + output proj + residual
# ---------------------------------------------------------------------------

def _attn_block_kernel(x_ref, g_ref, b_ref, wqkv_ref, bqkv_ref, wp_ref, bp_ref,
                       o_ref, *, n_heads, scale, eps):
    x = x_ref[0]                                               # (N, D) fp32
    N, D = x.shape
    dh = D // n_heads

    # LayerNorm (fp32 statistics).
    mu = jnp.mean(x, axis=-1, keepdims=True)
    var = jnp.mean(jnp.square(x - mu), axis=-1, keepdims=True)
    xn = (x - mu) * jax.lax.rsqrt(var + eps) * g_ref[...] + b_ref[...]

    # QKV projection: bf16 operands, fp32 accumulation. qkv stays in VMEM.
    qkv = jnp.dot(xn.astype(jnp.bfloat16), wqkv_ref[...],
                  preferred_element_type=jnp.float32) + bqkv_ref[...]   # (N, 3D)

    # Fold 1/sqrt(dh) into Q once ((N, D) VPU mul) instead of per-head (N, N).
    q_all = (qkv[:, :D] * scale).astype(jnp.bfloat16)
    k_all = qkv[:, D:2 * D].astype(jnp.bfloat16)
    v_all = qkv[:, 2 * D:].astype(jnp.bfloat16)

    # Per-head attention; head slicing is a static lane slice of a VMEM value,
    # so no HBM reshape/transpose and only one (N, N) score matrix live at a time.
    acc = jnp.zeros((N, D), jnp.float32)
    for h in range(n_heads):
        lo, hi = h * dh, (h + 1) * dh
        s = jax.lax.dot_general(
            q_all[:, lo:hi], k_all[:, lo:hi],
            (((1,), (1,)), ((), ())),
            preferred_element_type=jnp.float32)                          # (N, N)
        s = s - jnp.max(s, axis=-1, keepdims=True)
        p = jnp.exp(s)
        p = p * pl.reciprocal(jnp.sum(p, axis=-1, keepdims=True), approx=True)
        o_h = jnp.dot(p.astype(jnp.bfloat16), v_all[:, lo:hi],
                      preferred_element_type=jnp.float32)                # (N, dh)
        # Fold the head-concat + output projection into a per-head accumulation.
        acc = acc + jnp.dot(o_h.astype(jnp.bfloat16), wp_ref[lo:hi, :],
                            preferred_element_type=jnp.float32)

    # Output projection bias + residual, written once (drop_path/dropout = identity).
    o_ref[0] = (x + acc + bp_ref[...]).astype(o_ref.dtype)


def attn_block(x, g, b, wqkv, bqkv, wproj, bproj, n_heads):
    B, N, D = x.shape
    dh = D // n_heads
    kernel = functools.partial(_attn_block_kernel, n_heads=n_heads,
                               scale=dh ** (-0.5), eps=_EPS)
    return pl.pallas_call(
        kernel,
        out_shape=jax.ShapeDtypeStruct((B, N, D), jnp.float32),
        grid=(B,),
        in_specs=[
            pl.BlockSpec((1, N, D), lambda i: (i, 0, 0)),
            pl.BlockSpec((1, D), lambda i: (0, 0)),
            pl.BlockSpec((1, D), lambda i: (0, 0)),
            pl.BlockSpec((D, 3 * D), lambda i: (0, 0)),
            pl.BlockSpec((1, 3 * D), lambda i: (0, 0)),
            pl.BlockSpec((D, D), lambda i: (0, 0)),
            pl.BlockSpec((1, D), lambda i: (0, 0)),
        ],
        out_specs=pl.BlockSpec((1, N, D), lambda i: (i, 0, 0)),
        compiler_params=pltpu.CompilerParams(
            dimension_semantics=("parallel",), vmem_limit_bytes=_VMEM_LIMIT),
    )(x, g.reshape(1, D), b.reshape(1, D), wqkv, bqkv.reshape(1, 3 * D),
      wproj, bproj.reshape(1, D))


# ---------------------------------------------------------------------------
# Kernel 3: fused LN2 + fc1 + GELU + fc2 + residual (MLP), tiled over tokens
# ---------------------------------------------------------------------------

def _mlp_block_kernel(x_ref, g_ref, b_ref, w1_ref, b1_ref, w2_ref, b2_ref,
                      o_ref, *, eps):
    x = x_ref[0]                                               # (tn, D) fp32
    mu = jnp.mean(x, axis=-1, keepdims=True)
    var = jnp.mean(jnp.square(x - mu), axis=-1, keepdims=True)
    xn = (x - mu) * jax.lax.rsqrt(var + eps) * g_ref[...] + b_ref[...]

    hidden = jnp.dot(xn.astype(jnp.bfloat16), w1_ref[...],
                     preferred_element_type=jnp.float32) + b1_ref[...]
    hidden = jax.nn.gelu(hidden, approximate=False)            # torch nn.GELU default
    y = jnp.dot(hidden.astype(jnp.bfloat16), w2_ref[...],
                preferred_element_type=jnp.float32) + b2_ref[...]
    o_ref[0] = (x + y).astype(o_ref.dtype)


def mlp_block(x, g, b, w1, b1, w2, b2):
    B, N, D = x.shape
    F = w1.shape[1]
    tn = _pick_row_tile(N)
    nt = pl.cdiv(N, tn)
    kernel = functools.partial(_mlp_block_kernel, eps=_EPS)
    return pl.pallas_call(
        kernel,
        out_shape=jax.ShapeDtypeStruct((B, N, D), jnp.float32),
        grid=(B, nt),                                          # 2 parallel axes (v7x megacore)
        in_specs=[
            pl.BlockSpec((1, tn, D), lambda i, j: (i, j, 0)),
            pl.BlockSpec((1, D), lambda i, j: (0, 0)),
            pl.BlockSpec((1, D), lambda i, j: (0, 0)),
            pl.BlockSpec((D, F), lambda i, j: (0, 0)),
            pl.BlockSpec((1, F), lambda i, j: (0, 0)),
            pl.BlockSpec((F, D), lambda i, j: (0, 0)),
            pl.BlockSpec((1, D), lambda i, j: (0, 0)),
        ],
        out_specs=pl.BlockSpec((1, tn, D), lambda i, j: (i, j, 0)),
        compiler_params=pltpu.CompilerParams(
            dimension_semantics=("parallel", "parallel"),
            vmem_limit_bytes=_VMEM_LIMIT),
    )(x, g.reshape(1, D), b.reshape(1, D), w1, b1.reshape(1, F), w2, b2.reshape(1, D))


# ---------------------------------------------------------------------------
# Kernel 4: fused decoder_norm + projections + L2-normalize + masks + mask_norm
# (class axis zero-padded to a multiple of 128 for a lane-dense output store)
# ---------------------------------------------------------------------------

def _mask_head_kernel(x_ref, g_ref, b_ref, wp_ref, wc_ref, mg_ref, mb_ref,
                      o_ref, *, n_cls, n_cls_pad, eps):
    x = x_ref[0]                                               # (Ntot, D) fp32
    mu = jnp.mean(x, axis=-1, keepdims=True)
    var = jnp.mean(jnp.square(x - mu), axis=-1, keepdims=True)
    xn = (x - mu) * jax.lax.rsqrt(var + eps) * g_ref[...] + b_ref[...]

    np_rows = x.shape[0] - n_cls
    patches = xn[:np_rows]                                     # (Np, D)
    cls_tok = xn[np_rows:]                                     # (n_cls, D)

    p = jnp.dot(patches.astype(jnp.bfloat16), wp_ref[...],
                preferred_element_type=jnp.float32)
    c = jnp.dot(cls_tok.astype(jnp.bfloat16), wc_ref[...],
                preferred_element_type=jnp.float32)
    # L2 normalize via rsqrt (EUP). No epsilon, matching the PyTorch reference.
    p = p * jax.lax.rsqrt(jnp.sum(p * p, axis=-1, keepdims=True))
    c = c * jax.lax.rsqrt(jnp.sum(c * c, axis=-1, keepdims=True))

    # Zero-pad the class rows AFTER normalization (avoids 0/0) so that the
    # masks matmul output is natively (Np, n_cls_pad): a lane-dense slab whose
    # padded columns are exactly zero.
    if n_cls_pad > n_cls:
        c = jnp.concatenate(
            [c, jnp.zeros((n_cls_pad - n_cls, c.shape[1]), jnp.float32)], axis=0)

    # masks = patches @ cls_seg_feat^T (contract feature dims).
    m = jax.lax.dot_general(p.astype(jnp.bfloat16), c.astype(jnp.bfloat16),
                            (((1,), (1,)), ((), ())),
                            preferred_element_type=jnp.float32)          # (Np, ncp)

    # mask_norm statistics over the REAL n_cls columns only; padded columns are
    # exactly zero so they contribute nothing to sum / sum-of-squares.
    inv_ncls = jnp.float32(1.0 / n_cls)
    s1 = jnp.sum(m, axis=-1, keepdims=True)
    s2 = jnp.sum(m * m, axis=-1, keepdims=True)
    mmu = s1 * inv_ncls
    mvar = s2 * inv_ncls - mmu * mmu
    # gamma/beta are zero-padded, so padded output columns stay finite (= 0).
    o_ref[0] = ((m - mmu) * jax.lax.rsqrt(mvar + eps) * mg_ref[...]
                + mb_ref[...]).astype(o_ref.dtype)


def mask_head(x, g, b, wp, wc, mg, mb, n_cls):
    B, Ntot, D = x.shape
    Np = Ntot - n_cls
    ncp = ((n_cls + 127) // 128) * 128                         # lane-dense class axis
    mg_p = jnp.pad(mg, (0, ncp - n_cls)).reshape(1, ncp)
    mb_p = jnp.pad(mb, (0, ncp - n_cls)).reshape(1, ncp)
    kernel = functools.partial(_mask_head_kernel, n_cls=n_cls, n_cls_pad=ncp,
                               eps=_EPS)
    out = pl.pallas_call(
        kernel,
        out_shape=jax.ShapeDtypeStruct((B, Np, ncp), jnp.float32),
        grid=(B,),
        in_specs=[
            pl.BlockSpec((1, Ntot, D), lambda i: (i, 0, 0)),
            pl.BlockSpec((1, D), lambda i: (0, 0)),
            pl.BlockSpec((1, D), lambda i: (0, 0)),
            pl.BlockSpec((D, D), lambda i: (0, 0)),
            pl.BlockSpec((D, D), lambda i: (0, 0)),
            pl.BlockSpec((1, ncp), lambda i: (0, 0)),
            pl.BlockSpec((1, ncp), lambda i: (0, 0)),
        ],
        out_specs=pl.BlockSpec((1, Np, ncp), lambda i: (i, 0, 0)),
        compiler_params=pltpu.CompilerParams(
            dimension_semantics=("parallel",), vmem_limit_bytes=_VMEM_LIMIT),
    )(x, g.reshape(1, D), b.reshape(1, D), wp, wc, mg_p, mb_p)
    # Layout plumbing only: drop the zero padding of the class axis.
    return out[:, :, :n_cls]


# ---------------------------------------------------------------------------
# Model: parameter init + forward
# ---------------------------------------------------------------------------

def init_params(seed, n_layers, d_model, d_encoder, d_ff, n_heads, n_cls):
    key = jax.random.PRNGKey(seed)

    def nk():
        nonlocal key
        key, sub = jax.random.split(key)
        return sub

    scale = d_model ** (-0.5)
    f32, bf16 = jnp.float32, jnp.bfloat16
    params = {
        "n_heads": n_heads,
        "n_cls": n_cls,
        "cls_emb": (0.02 * jax.random.normal(nk(), (1, n_cls, d_model), f32)),
        # Matmul weights stored in bf16 (MXU operands, halves HBM/VMEM traffic).
        "proj_dec_w": (0.02 * jax.random.normal(nk(), (d_encoder, d_model), f32)).astype(bf16),
        "proj_dec_b": jnp.zeros((d_model,), f32),
        "proj_patch": (scale * jax.random.normal(nk(), (d_model, d_model), f32)).astype(bf16),
        "proj_classes": (scale * jax.random.normal(nk(), (d_model, d_model), f32)).astype(bf16),
        "decoder_norm_g": jnp.ones((d_model,), f32),
        "decoder_norm_b": jnp.zeros((d_model,), f32),
        "mask_norm_g": jnp.ones((n_cls,), f32),
        "mask_norm_b": jnp.zeros((n_cls,), f32),
        "blocks": [],
    }
    for _ in range(n_layers):
        blk = {
            "norm1_g": jnp.ones((d_model,), f32),
            "norm1_b": jnp.zeros((d_model,), f32),
            "norm2_g": jnp.ones((d_model,), f32),
            "norm2_b": jnp.zeros((d_model,), f32),
            "qkv_w": (0.02 * jax.random.normal(nk(), (d_model, 3 * d_model), f32)).astype(bf16),
            "qkv_b": jnp.zeros((3 * d_model,), f32),
            "proj_w": (0.02 * jax.random.normal(nk(), (d_model, d_model), f32)).astype(bf16),
            "proj_b": jnp.zeros((d_model,), f32),
            "fc1_w": (0.02 * jax.random.normal(nk(), (d_model, d_ff), f32)).astype(bf16),
            "fc1_b": jnp.zeros((d_ff,), f32),
            "fc2_w": (0.02 * jax.random.normal(nk(), (d_ff, d_model), f32)).astype(bf16),
            "fc2_b": jnp.zeros((d_model,), f32),
        }
        params["blocks"].append(blk)
    return params


def segmentation_transformer_forward(params, x, im_size, patch_code):
    """Mirror of SegmentationTransformer.forward (eval semantics).

    x: (B, N_patches, d_encoder) float32. im_size / patch_code are accepted for
    signature parity; im_size only produces GS which the reference never uses.
    """
    del im_size, patch_code
    p = params
    n_cls = p["n_cls"]
    n_heads = p["n_heads"]

    # proj_dec + append class embeddings, fused (no separate XLA concat pass).
    x = proj_dec_concat(x, p["proj_dec_w"], p["proj_dec_b"], p["cls_emb"])

    for blk in p["blocks"]:
        # self-attention sub-block (pre-norm, residual), fully fused.
        x = attn_block(x, blk["norm1_g"], blk["norm1_b"],
                       blk["qkv_w"], blk["qkv_b"],
                       blk["proj_w"], blk["proj_b"], n_heads=n_heads)
        # MLP sub-block (pre-norm, residual), fully fused, token-tiled.
        x = mlp_block(x, blk["norm2_g"], blk["norm2_b"],
                      blk["fc1_w"], blk["fc1_b"], blk["fc2_w"], blk["fc2_b"])

    # decoder_norm + mask head, fused (lane-dense padded store inside).
    masks = mask_head(x, p["decoder_norm_g"], p["decoder_norm_b"],
                      p["proj_patch"], p["proj_classes"],
                      p["mask_norm_g"], p["mask_norm_b"], n_cls=n_cls)
    return masks                                               # (B, N_patches, n_cls)


# ---------------------------------------------------------------------------

if __name__ == "__main__":
    # Small, shape-consistent config
    image_size, patch_size = 16, 4
    n_layers, d_model, d_encoder, d_ff, n_heads, n_cls = 2, 32, 32, 64, 4, 3
    B = 2
    GS = image_size // patch_size
    N = GS * GS                                                # 16 patch tokens

    key = jax.random.PRNGKey(0)
    x = jax.random.normal(key, (B, N, d_encoder), jnp.float32)

    params = init_params(1, n_layers, d_model, d_encoder, d_ff, n_heads, n_cls)

    masks = segmentation_transformer_forward(
        params, x, im_size=(image_size, image_size), patch_code=None)
    masks = jax.block_until_ready(masks)

    assert masks.shape == (B, N, n_cls), masks.shape
    assert bool(jnp.all(jnp.isfinite(masks)))
    print("KERNEL_OK")
</pallas_src>

<mosaic_0001>
module attributes {stable_mosaic.version = 11 : i64} {
  func.func @_proj_dec_kernel(%arg0: i32, %arg1: memref<1x16x32xf32, #tpu.memory_space<vmem>>, %arg2: memref<32x32xbf16, #tpu.memory_space<vmem>>, %arg3: memref<1x32xf32, #tpu.memory_space<vmem>>, %arg4: memref<1x3x32xf32, #tpu.memory_space<vmem>>, %arg5: memref<1x19x32xf32, #tpu.memory_space<vmem>>) attributes {dimension_semantics = [#tpu.dimension_semantics<parallel>], iteration_bounds = array<i64: 2>, scalar_prefetch = 0 : i64, scratch_operands = 0 : i64, tpu.core_type = #tpu.core_type<tc>, window_params = [{transform_indices = @transform_0, window_bounds = array<i64: 1, 16, 32>}, {pipeline_mode = #tpu.pipeline_mode<synchronous>, transform_indices = @transform_1, window_bounds = array<i64: 32, 32>}, {pipeline_mode = #tpu.pipeline_mode<synchronous>, transform_indices = @transform_2, window_bounds = array<i64: 1, 32>}, {pipeline_mode = #tpu.pipeline_mode<synchronous>, transform_indices = @transform_3, window_bounds = array<i64: 1, 3, 32>}, {transform_indices = @transform_4, window_bounds = array<i64: 1, 19, 32>}]} {
    %c0 = arith.constant 0 : index
    %c0_0 = arith.constant 0 : index
    %c0_1 = arith.constant 0 : index
    %0 = vector.load %arg1[%c0, %c0_0, %c0_1] : memref<1x16x32xf32, #tpu.memory_space<vmem>>, vector<1x16x32xf32>
    %1 = vector.shape_cast %0 : vector<1x16x32xf32> to vector<16x32xf32>
    %2 = arith.truncf %1 : vector<16x32xf32> to vector<16x32xbf16>
    %c0_2 = arith.constant 0 : index
    %c0_3 = arith.constant 0 : index
    %3 = vector.load %arg2[%c0_2, %c0_3] : memref<32x32xbf16, #tpu.memory_space<vmem>>, vector<32x32xbf16>
    %cst = arith.constant dense<0.000000e+00> : vector<16x32xf32>
    %4 = tpu.matmul %2, %3, %cst {dimension_numbers = #tpu.dot_dimension_numbers<[1], [0], [0], [1], [0, 0, 1, 1], [], []>} : vector<16x32xbf16>, vector<32x32xbf16>, vector<16x32xf32> -> vector<16x32xf32>
    %c0_4 = arith.constant 0 : index
    %c0_5 = arith.constant 0 : index
    %5 = vector.load %arg3[%c0_4, %c0_5] : memref<1x32xf32, #tpu.memory_space<vmem>>, vector<1x32xf32>
    %6 = vector.broadcast %5 : vector<1x32xf32> to vector<16x32xf32>
    %7 = arith.addf %4, %6 : vector<16x32xf32>
    %c0_6 = arith.constant 0 : index
    %c0_7 = arith.constant 0 : index
    %c0_8 = arith.constant 0 : index
    %8 = vector.load %arg5[%c0_6, %c0_7, %c0_8] : memref<1x19x32xf32, #tpu.memory_space<vmem>>, vector<1x16x32xf32>
    %9 = vector.shape_cast %8 : vector<1x16x32xf32> to vector<16x32xf32>
    %10 = vector.shape_cast %7 : vector<16x32xf32> to vector<1x16x32xf32>
    tpu.vector_store %arg5[%c0_6, %c0_7, %c0_8], %10 {strides = array<i32>} : memref<1x19x32xf32, #tpu.memory_space<vmem>>, vector<1x16x32xf32>,
    %c0_9 = arith.constant 0 : index
    %c0_10 = arith.constant 0 : index
    %c0_11 = arith.constant 0 : index
    %11 = vector.load %arg4[%c0_9, %c0_10, %c0_11] : memref<1x3x32xf32, #tpu.memory_space<vmem>>, vector<1x3x32xf32>
    %12 = vector.shape_cast %11 : vector<1x3x32xf32> to vector<3x32xf32>
    %c0_12 = arith.constant 0 : index
    %c16 = arith.constant 16 : index
    %c0_13 = arith.constant 0 : index
    %13 = vector.load %arg5[%c0_12, %c16, %c0_13] : memref<1x19x32xf32, #tpu.memory_space<vmem>>, vector<1x3x32xf32>
    %14 = vector.shape_cast %13 : vector<1x3x32xf32> to vector<3x32xf32>
    %15 = vector.shape_cast %12 : vector<3x32xf32> to vector<1x3x32xf32>
    tpu.vector_store %arg5[%c0_12, %c16, %c0_13], %15 {strides = array<i32>} : memref<1x19x32xf32, #tpu.memory_space<vmem>>, vector<1x3x32xf32>,
    return
  }
  func.func @transform_0(%arg0: i32) -> (i32, i32, i32) {
    %c0_i32 = arith.constant 0 : i32
    %c0_i32_0 = arith.constant 0 : i32
    %c0_i32_1 = arith.constant 0 : i32
    return %arg0, %c0_i32, %c0_i32_0 : i32, i32, i32
  }
  func.func @transform_1(%arg0: i32) -> (i32, i32) {
    %c0_i32 = arith.constant 0 : i32
    %c0_i32_0 = arith.constant 0 : i32
    %c0_i32_1 = arith.constant 0 : i32
    return %c0_i32, %c0_i32_0 : i32, i32
  }
  func.func @transform_2(%arg0: i32) -> (i32, i32) {
    %c0_i32 = arith.constant 0 : i32
    %c0_i32_0 = arith.constant 0 : i32
    %c0_i32_1 = arith.constant 0 : i32
    return %c0_i32, %c0_i32_0 : i32, i32
  }
  func.func @transform_3(%arg0: i32) -> (i32, i32, i32) {
    %c0_i32 = arith.constant 0 : i32
    %c0_i32_0 = arith.constant 0 : i32
    %c0_i32_1 = arith.constant 0 : i32
    %c0_i32_2 = arith.constant 0 : i32
    return %c0_i32, %c0_i32_0, %c0_i32_1 : i32, i32, i32
  }
  func.func @transform_4(%arg0: i32) -> (i32, i32, i32) {
    %c0_i32 = arith.constant 0 : i32
    %c0_i32_0 = arith.constant 0 : i32
    %c0_i32_1 = arith.constant 0 : i32
    return %arg0, %c0_i32, %c0_i32_0 : i32, i32, i32
  }
}

</mosaic_0001>

<llo_original>
// kernel: tpu_custom_call.1
$region0: #{tpu_custom_call.1}
  #allocation0 [shape = 'u32[]', space=smem, size = 0x4, offset = 0x4, fixed_abs, tag = 'smem constant byte address 0x4 - core index']
  #allocation1 [shape = 'u32[144,128]{1,0:T(1,128)}', space=vmem, size = 0x12000, scoped, tag = 'internal scratch']
  %s0 = inlined_call_operand.hbm [shape: f32[2,16,32], index: 0, kind: input, shape index: {}]
  %s1 = inlined_call_operand.hbm [shape: bf16[32,32], index: 1, kind: input, shape index: {}]
  %s2 = inlined_call_operand.hbm [shape: f32[1,32], index: 2, kind: input, shape index: {}]
  %s3 = inlined_call_operand.hbm [shape: f32[1,3,32], index: 3, kind: input, shape index: {}]
  %s4 = inlined_call_operand.hbm [shape: f32[2,19,32], index: 4, kind: output, shape index: {}]
  %s5 = sld [smem:[#allocation0]]
  $region65: #{tpu_custom_call.1} parent=0
    _
  %s7 = ssub.s32 1, %s5
  %s8 = scalar_select 0, %s7, %s5
  $region1: #{tpu_custom_call.1} parent=0
    #allocation2 [shape = 'u8[16384]{0}', space=vmem, size = 0x4000, scoped, tag = 'input window, operand 0']
    #allocation3 [shape = 's32[2]{0}', space=sflag, size = 0x8, scoped, tag = 'scoped memory for tpu_custom_call.1']
    #allocation4 [shape = 's32[2]{0}', space=sflag, size = 0x8, scoped, tag = 'scoped memory for tpu_custom_call.1']
    #allocation5 [shape = 'u8[8192]{0}', space=vmem, size = 0x2000, scoped, tag = 'input window, operand 1, single buffered']
    #allocation6 [shape = 's32[1]{0}', space=sflag, size = 0x4, scoped, tag = 'scoped memory for tpu_custom_call.1']
    #allocation7 [shape = 'u8[512]{0}', space=vmem, size = 0x400, scoped, tag = 'input window, operand 2, single buffered']
    #allocation8 [shape = 'u8[2048]{0}', space=vmem, size = 0x800, scoped, tag = 'input window, operand 3, single buffered']
    #allocation9 [shape = 's32[1]{0}', space=sflag, size = 0x4, scoped, tag = 'scoped memory for tpu_custom_call.1']
    #allocation10 [shape = 'u8[24576]{0}', space=vmem, size = 0x6000, scoped, tag = 'output window, operand 0']
    %9 = vsyncpa [#allocation3], 0
    %s10 = scalar_lea.sflag [#allocation3], 1
    %11 = vsyncpa %s10, 0
    %12 = vsyncpa [#allocation6], 0
    %13 = vsyncpa [#allocation9], 0
    %14 = vsyncpa [#allocation4], 0
    %s15 = scalar_lea.sflag [#allocation4], 1
    %16 = vsyncpa %s15, 0
    loop: start=0, step=1, limit=4
    $region2: #{tpu_custom_call.1} parent=1 // loop_pre_header
      _
    $region3: #{tpu_custom_call.1} parent=1 // loop_header
      %s18 = sphi 0, %s22
      %p19 = scmp.ge.s32.totalorder %s18, 4
      %s28 = sphi 0, %s30
      %s31 = sphi 0, %s28
      %s32 = sphi 0, %s31
      %s48 = sphi 0, %s32
      %s52 = sphi 0, %s52
      %s54 = sphi 0, %s52
      %s55 = sphi 0, %s54
      %s69 = sphi 0, %s55
      %s73 = sphi 0, %s73
      %s75 = sphi 0, %s73
      %s76 = sphi 0, %s75
      %s90 = sphi 0, %s76
      %s94 = sphi 0, %s94
      %s96 = sphi 0, %s94
      %s97 = sphi 0, %s96
      %s111 = sphi 0, %s97
      %s117 = sphi 0, %s119
      %s120 = sphi 0, %s117
      %s121 = sphi 0, %s120
      %s137 = sphi 0, %s121
    $region4: #{tpu_custom_call.1} parent=1 // loop_header_branch
      %21 = sbr.rel (%p19) target = $region8
    $region5: #{tpu_custom_call.1} parent=1 // loop_body
      %s23 = ssub.s32 %s18, 1
      %s24 = ssub.s32 %s18, 2
      %s25 = sadd.s32 %s18, 1
      %s26 = ssub.s32 %s18, %s25
      %p27 = scmp.eq.s32.totalorder %s26, 0
      %s29 = sadd.s32 %s28, 1
      %s30 = scalar_select %p27, %s28, %s29
      %p33 = pneg %p27
      %p34 = scmp.eq.s32.totalorder %s18, 1
      %p35 = por %p33, %p34
      %p36 = scmp.ne.s32.totalorder %s28, %s31
      %p37 = scmp.eq.s32.totalorder %s18, 0
      %p38 = por %p36, %p37
      %p39 = scmp.ne.s32.totalorder %s28, %s31
      %p40 = scmp.eq.s32.totalorder %s23, 1
      %p41 = por %p39, %p40
      %p42 = scmp.ne.s32.totalorder %s31, %s32
      %p43 = scmp.eq.s32.totalorder %s23, 0
      %p44 = por %p42, %p43
      %p45 = scmp.ne.s32.totalorder %s31, %s32
      %p46 = scmp.eq.s32.totalorder %s24, 1
      %p47 = por %p45, %p46
      %p49 = scmp.ne.s32.totalorder %s32, %s48
      %p50 = scmp.eq.s32.totalorder %s24, 0
      %p51 = por %p49, %p50
      %s53 = sadd.s32 %s52, 1
      %p56 = scmp.eq.s32.totalorder %s18, 1
      %p57 = scmp.ne.s32.totalorder %s52, %s54
      %p58 = scmp.eq.s32.totalorder %s18, 0
      %p59 = por %p57, %p58
      %p60 = scmp.ne.s32.totalorder %s52, %s54
      %p61 = scmp.eq.s32.totalorder %s23, 1
      %p62 = por %p60, %p61
      %p63 = scmp.ne.s32.totalorder %s54, %s55
      %p64 = scmp.eq.s32.totalorder %s23, 0
      %p65 = por %p63, %p64
      %p66 = scmp.ne.s32.totalorder %s54, %s55
      %p67 = scmp.eq.s32.totalorder %s24, 1
      %p68 = por %p66, %p67
      %p70 = scmp.ne.s32.totalorder %s55, %s69
      %p71 = scmp.eq.s32.totalorder %s24, 0
      %p72 = por %p70, %p71
      %s74 = sadd.s32 %s73, 1
      %p77 = scmp.eq.s32.totalorder %s18, 1
      %p78 = scmp.ne.s32.totalorder %s73, %s75
      %p79 = scmp.eq.s32.totalorder %s18, 0
      %p80 = por %p78, %p79
      %p81 = scmp.ne.s32.totalorder %s73, %s75
      %p82 = scmp.eq.s32.totalorder %s23, 1
      %p83 = por %p81, %p82
      %p84 = scmp.ne.s32.totalorder %s75, %s76
      %p85 = scmp.eq.s32.totalorder %s23, 0
      %p86 = por %p84, %p85
      %p87 = scmp.ne.s32.totalorder %s75, %s76
      %p88 = scmp.eq.s32.totalorder %s24, 1
      %p89 = por %p87, %p88
      %p91 = scmp.ne.s32.totalorder %s76, %s90
      %p92 = scmp.eq.s32.totalorder %s24, 0
      %p93 = por %p91, %p92
      %s95 = sadd.s32 %s94, 1
      %p98 = scmp.eq.s32.totalorder %s18, 1
      %p99 = scmp.ne.s32.totalorder %s94, %s96
      %p100 = scmp.eq.s32.totalorder %s18, 0
      %p101 = por %p99, %p100
      %p102 = scmp.ne.s32.totalorder %s94, %s96
      %p103 = scmp.eq.s32.totalorder %s23, 1
      %p104 = por %p102, %p103
      %p105 = scmp.ne.s32.totalorder %s96, %s97
      %p106 = scmp.eq.s32.totalorder %s23, 0
      %p107 = por %p105, %p106
      %p108 = scmp.ne.s32.totalorder %s96, %s97
      %p109 = scmp.eq.s32.totalorder %s24, 1
      %p110 = por %p108, %p109
      %p112 = scmp.ne.s32.totalorder %s97, %s111
      %p113 = scmp.eq.s32.totalorder %s24, 0
      %p114 = por %p112, %p113
      %s115 = ssub.s32 %s18, %s25
      %p116 = scmp.eq.s32.totalorder %s115, 0
      %s118 = sadd.s32 %s117, 1
      %s119 = scalar_select %p116, %s117, %s118
      %p122 = pneg %p116
      %p123 = scmp.eq.s32.totalorder %s18, 1
      %p124 = por %p122, %p123
      %p125 = scmp.ne.s32.totalorder %s117, %s120
      %p126 = scmp.eq.s32.totalorder %s18, 0
      %p127 = por %p125, %p126
      %p128 = scmp.ne.s32.totalorder %s117, %s120
      %p129 = scmp.eq.s32.totalorder %s23, 1
      %p130 = por %p128, %p129
      %p131 = scmp.ne.s32.totalorder %s120, %s121
      %p132 = scmp.eq.s32.totalorder %s23, 0
      %p133 = por %p131, %p132
      %p134 = scmp.ne.s32.totalorder %s120, %s121
      %p135 = scmp.eq.s32.totalorder %s24, 1
      %p136 = por %p134, %p135
      %p138 = scmp.ne.s32.totalorder %s121, %s137
      %p139 = scmp.eq.s32.totalorder %s24, 0
      %p140 = por %p138, %p139
      %p141 = scmp.le.s32.totalorder 1, %s18
      %p142 = scmp.lt.s32.totalorder %s18, 3
      %p143 = pnand %p141, %p142
      %p144 = pneg %p143
      // Predicated region
      $region9: #{tpu_custom_call.1} parent=5 // pred_check
        _
      $region10: #{tpu_custom_call.1} parent=5 // pred_check_branch
        %146 = sbr.rel (%p143) target = $region12
      $region11: #{tpu_custom_call.1} parent=5 // pred_region
        %s147 = ssub.s32 %s18, 1
        // Predicated region
        $region13: #{tpu_custom_call.1} parent=11 // pred_check
          %p148 = pneg %p65
        $region14: #{tpu_custom_call.1} parent=11 // pred_check_branch
          %150 = sbr.rel (%p148) target = $region16
        $region15: #{tpu_custom_call.1} parent=11 // pred_region
          %s152 = ssub.s32 256, 256
          %153 = vsyncadd [#allocation6], %s152
          %s154 = sshll.u32 [#allocation5], 4
          %s155 = int_to_ptr.vmem [resolvable:$true] %s154
          %160 = dma.hbm_to_vmem [thread:$0]  %s1, 256, %s155, [#allocation6], 64, 64, 4
        $region16: #{tpu_custom_call.1} parent=11 // pred_fallthru
          _
        // Predicated region
        $region17: #{tpu_custom_call.1} parent=11 // pred_check
          %p161 = pneg %p86
        $region18: #{tpu_custom_call.1} parent=11 // pred_check_branch
          %163 = sbr.rel (%p161) target = $region20
        $region19: #{tpu_custom_call.1} parent=11 // pred_region
          %s165 = ssub.s32 16, 16
          %166 = vsyncadd [#allocation6], %s165
          %s168 = sshll.u32 [#allocation7], 4
          %s169 = int_to_ptr.vmem [resolvable:$true] %s168
          %171 = dma.hbm_to_vmem [thread:$0]  %s2, 16, %s169, [#allocation6]
        $region20: #{tpu_custom_call.1} parent=11 // pred_fallthru
          _
        // Predicated region
        $region21: #{tpu_custom_call.1} parent=11 // pred_check
          %p172 = pneg %p107
        $region22: #{tpu_custom_call.1} parent=11 // pred_check_branch
          %174 = sbr.rel (%p172) target = $region24
        $region23: #{tpu_custom_call.1} parent=11 // pred_region
          %s176 = ssub.s32 64, 64
          %177 = vsyncadd [#allocation9], %s176
          %s179 = sshll.u32 [#allocation8], 4
          %s180 = int_to_ptr.vmem [resolvable:$true] %s179
          %182 = dma.hbm_to_vmem [thread:$0]  %s3, 64, %s180, [#allocation9]
        $region24: #{tpu_custom_call.1} parent=11 // pred_fallthru
          _
      $region12: #{tpu_custom_call.1} parent=5 // pred_fallthru
        _
      %p183 = scmp.lt.s32.totalorder %s18, 2
      // Predicated region
      $region25: #{tpu_custom_call.1} parent=5 // pred_check
        %p184 = pneg %p183
      $region26: #{tpu_custom_call.1} parent=5 // pred_check_branch
        %186 = sbr.rel (%p184) target = $region28
      $region27: #{tpu_custom_call.1} parent=5 // pred_region
        // Predicated region
        $region29: #{tpu_custom_call.1} parent=27 // pred_check
          %p187 = pneg %p38
        $region30: #{tpu_custom_call.1} parent=27 // pred_check_branch
          %189 = sbr.rel (%p187) target = $region32
        $region31: #{tpu_custom_call.1} parent=27 // pred_region
          %s190 = sand.u32 %s28, 1
          %s191 = scalar_lea.sflag [#allocation3], %s190
          %s192 = sand.u32 %s28, 1
          %s193 = smul.addr %s192, 16
          %s194 = scalar_lea.vmem [#allocation2], %s193
          %s196 = ssub.s32 256, 256
          %197 = vsyncadd %s191, %s196
          %s198 = smul.addr %s18, 2
          %s199 = smul.addr %s198, 128
          %s200 = scalar_lea.hbm %s0, %s199
          %s201 = sshll.u32 %s194, 4
          %s202 = int_to_ptr.vmem [resolvable:$true] %s201
          %207 = dma.hbm_to_vmem [thread:$0]  %s200, 256, %s202, %s191, 128, 128, 8
        $region32: #{tpu_custom_call.1} parent=27 // pred_fallthru
          _
      $region28: #{tpu_custom_call.1} parent=5 // pred_fallthru
        _
      %p208 = scmp.le.s32.totalorder 1, %s18
      %p209 = scmp.lt.s32.totalorder %s18, 3
      %p210 = pnand %p208, %p209
      %p211 = pneg %p210
      // Predicated region
      $region33: #{tpu_custom_call.1} parent=5 // pred_check
        _
      $region34: #{tpu_custom_call.1} parent=5 // pred_check_branch
        %213 = sbr.rel (%p210) target = $region36
      $region35: #{tpu_custom_call.1} parent=5 // pred_region
        %s214 = ssub.s32 %s18, 1
        %s215 = sand.u32 %s31, 1
        %s216 = scalar_lea.sflag [#allocation3], %s215
        %s217 = sand.u32 %s31, 1
        %s218 = smul.addr %s217, 16
        %s219 = scalar_lea.vmem [#allocation2], %s218
        // Predicated region
        $region37: #{tpu_custom_call.1} parent=35 // pred_check
          %p220 = pneg %p44
        $region38: #{tpu_custom_call.1} parent=35 // pred_check_branch
          %222 = sbr.rel (%p220) target = $region40
        $region39: #{tpu_custom_call.1} parent=35 // pred_region
          %223 = dma.done %s216, 256
        $region40: #{tpu_custom_call.1} parent=35 // pred_fallthru
          _
        // Predicated region
        $region41: #{tpu_custom_call.1} parent=35 // pred_check
          %p224 = pneg %p65
        $region42: #{tpu_custom_call.1} parent=35 // pred_check_branch
          %226 = sbr.rel (%p224) target = $region44
        $region43: #{tpu_custom_call.1} parent=35 // pred_region
          %227 = dma.done [#allocation6], 256
        $region44: #{tpu_custom_call.1} parent=35 // pred_fallthru
          _
        // Predicated region
        $region45: #{tpu_custom_call.1} parent=35 // pred_check
          %p228 = pneg %p86
        $region46: #{tpu_custom_call.1} parent=35 // pred_check_branch
          %230 = sbr.rel (%p228) target = $region48
        $region47: #{tpu_custom_call.1} parent=35 // pred_region
          %231 = dma.done [#allocation6], 16
        $region48: #{tpu_custom_call.1} parent=35 // pred_fallthru
          _
        // Predicated region
        $region49: #{tpu_custom_call.1} parent=35 // pred_check
          %p232 = pneg %p107
        $region50: #{tpu_custom_call.1} parent=35 // pred_check_branch
          %234 = sbr.rel (%p232) target = $region52
        $region51: #{tpu_custom_call.1} parent=35 // pred_region
          %235 = dma.done [#allocation9], 64
        $region52: #{tpu_custom_call.1} parent=35 // pred_fallthru
          _
        %s236 = sand.u32 %s31, 1
        %s237 = scalar_lea.sflag [#allocation3], %s236
        %s238 = sand.u32 %s31, 1
        %s239 = smul.addr %s238, 16
        %s240 = scalar_lea.vmem [#allocation2], %s239
        %p241 = pneg %p44
        %p242 = pneg %p41
        %p243 = pneg %p65
        %p244 = pneg %p62
        %p245 = pneg %p86
        %p246 = pneg %p83
        %p247 = pneg %p107
        %p248 = pneg %p104
        %p249 = pneg %p133
        %p250 = pneg %p130
        %s251 = sand.u32 %s120, 1
        %s252 = scalar_lea.sflag [#allocation4], %s251
        %s253 = sand.u32 %s120, 1
        %s254 = smul.addr %s253, 24
        %s255 = scalar_lea.vmem [#allocation10], %s254
        %v257 = vld [vmem:[%s219] sm:$0xff]
        %v258 = vld [vmem:[%s219 + $0x8] sm:$0xff]
        %v259 = vpack.c.bf16 %v258, %v257
        %v260 = vld [vmem:[#allocation5] sm:$0xf]
        %v261 = vld [vmem:[#allocation5 + $0x4] sm:$0xf]
        %v262 = vld [vmem:[#allocation5 + $0x8] sm:$0xf]
        %v263 = vld [vmem:[#allocation5 + $0xc] sm:$0xf]
        %v264 = vld [vmem:[#allocation7] sm:$0x1]
        %v266 = vlaneseq
        %v267 = vshrl.u32 %v266, 7
        %v268 = vsub.s32 0, %v267
        %v269 = vrot.slane %v264, %v268
        %v275 = vunpack.c.l.b16 %v260
        %v276 = vunpack.c.l.b16 %v261
        %v277 = vunpack.c.l.b16 %v262
        %v278 = vunpack.c.l.b16 %v263
        %v279 = vpack.c.b16 %v276, %v275
        %v280 = vpack.c.b16 %v278, %v277
        %vm283 = vcmask 261120
        %v285 = vsel %vm283, %v259, 0
        %287 = vmatprep.subr.bf16.mxu0 0
        %288 = vmatpush1.bf16.msra.mxu0 %v279
        %289 = vmatprep.subr.bf16.mxu0 0
        %290 = vmatpush1.bf16.msra.mxu0 %v280
        %291 = vmatprep.subr.bf16.mxu0 0
        %292 = vmatpush1.bf16.msra.mxu0 0
        %293 = vmatprep.subr.bf16.mxu0 0
        %294 = vmatpush1.bf16.msra.mxu0 0
        %295 = vmatprep.subr.bf16.mxu0 0
        %296 = vmatpush1.bf16.msra.mxu0 0
        %297 = vmatprep.subr.bf16.mxu0 0
        %298 = vmatpush1.bf16.msra.mxu0 0
        %299 = vmatprep.subr.bf16.mxu0 0
        %300 = vmatpush1.bf16.msra.mxu0 0
        %301 = vmatprep.subr.bf16.mxu0 0
        %302 = vmatpush1.bf16.msra.mxu0 0
        %303 = vmatprep.subr.bf16.mxu0 0
        %304 = vmatpush1.bf16.msra.mxu0 0
        %305 = vmatprep.subr.bf16.mxu0 0
        %306 = vmatpush1.bf16.msra.mxu0 0
        %307 = vmatprep.subr.bf16.mxu0 0
        %308 = vmatpush1.bf16.msra.mxu0 0
        %309 = vmatprep.subr.bf16.mxu0 0
        %310 = vmatpush1.bf16.msra.mxu0 0
        %311 = vmatprep.subr.bf16.mxu0 0
        %312 = vmatpush1.bf16.msra.mxu0 0
        %313 = vmatprep.subr.bf16.mxu0 0
        %314 = vmatpush1.bf16.msra.mxu0 0
        %315 = vmatprep.subr.bf16.mxu0 0
        %316 = vmatpush1.bf16.msra.mxu0 0
        %317 = vmatprep.subr.bf16.mxu0 0
        %318 = vmatpush1.bf16.msra.mxu0 0
        %319 = vmatprep.mubr.bf16.mxu0 0
        %320 = vmatmul.mubr.bf16.gmra.mrb[0].mxu0 %v285
        %v321 = vpop.f32.mrb[0].mxu0
        %v322 = vadd.f32 %v269, %v321
        %v323 = vpop.f32.mrb[0].mxu0
        %v324 = vpop.f32.mrb[0].mxu0
        %v325 = vadd.f32 %v269, %v324
        %v326 = vpop.f32.mrb[0].mxu0
        %327 = vdwg.mxu0
        %328 = vst.msk [vmem:[%s255] sm:$0xff] %vm283, %v322
        %329 = vst.msk [vmem:[%s255 + $0x8] sm:$0xff] %vm283, %v325
        %v330 = vld [vmem:[#allocation8] sm:$0x7]
        %vm331 = vcmask 256000
        %332 = vst.msk [vmem:[%s255 + $0x10] sm:$0x7] %vm331, %v330
        %s333 = sand.u32 %s120, 1
        %s334 = scalar_lea.sflag [#allocation4], %s333
        %s335 = sand.u32 %s120, 1
        %s336 = smul.addr %s335, 24
        %s337 = scalar_lea.vmem [#allocation10], %s336
        // Predicated region
        $region53: #{tpu_custom_call.1} parent=35 // pred_check
          %p338 = pneg %p130
        $region54: #{tpu_custom_call.1} parent=35 // pred_check_branch
          %340 = sbr.rel (%p338) target = $region56
        $region55: #{tpu_custom_call.1} parent=35 // pred_region
          %s342 = ssub.s32 384, 384
          %343 = vsyncadd %s334, %s342
          %s344 = smul.addr %s23, 3
          %s345 = smul.addr %s344, 128
          %s346 = scalar_lea.hbm %s4, %s345
          %s347 = sshll.u32 %s337, 4
          %s348 = int_to_ptr.vmem [resolvable:$true] %s347
          %353 = dma.vmem_to_hbm [thread:$0]  %s348, 384, %s346, %s334, 128, 128, 8
        $region56: #{tpu_custom_call.1} parent=35 // pred_fallthru
          _
      $region36: #{tpu_custom_call.1} parent=5 // pred_fallthru
        _
      %p354 = scmp.le.s32.totalorder 2, %s18
      // Predicated region
      $region57: #{tpu_custom_call.1} parent=5 // pred_check
        %p355 = pneg %p354
      $region58: #{tpu_custom_call.1} parent=5 // pred_check_branch
        %357 = sbr.rel (%p355) target = $region60
      $region59: #{tpu_custom_call.1} parent=5 // pred_region
        %s358 = ssub.s32 %s18, 2
        // Predicated region
        $region61: #{tpu_custom_call.1} parent=59 // pred_check
          %p359 = pneg %p136
        $region62: #{tpu_custom_call.1} parent=59 // pred_check_branch
          %361 = sbr.rel (%p359) target = $region64
        $region63: #{tpu_custom_call.1} parent=59 // pred_region
          %s362 = sand.u32 %s121, 1
          %s363 = scalar_lea.sflag [#allocation4], %s362
          %s364 = sand.u32 %s121, 1
          %s365 = smul.addr %s364, 24
          %s366 = scalar_lea.vmem [#allocation10], %s365
          %367 = dma.done %s363, 384
        $region64: #{tpu_custom_call.1} parent=59 // pred_fallthru
          _
      $region60: #{tpu_custom_call.1} parent=5 // pred_fallthru
        _
    $region6: #{tpu_custom_call.1} parent=1 // loop_footer
      %s22 = sadd.s32 1, %s18
    $region7: #{tpu_custom_call.1} parent=1 // loop_footer_branch
      %17 = sbr.rel target = $region3
    $region8: #{tpu_custom_call.1} parent=1 // loop_exit
      _
    %368 = vsyncpa [#allocation3], 1
    %s369 = scalar_lea.sflag [#allocation3], 1
    %370 = vsyncpa %s369, 1
    %371 = vsyncpa [#allocation6], 1
    %372 = vsyncpa [#allocation9], 1
    %373 = vsyncpa [#allocation4], 1
    %s374 = scalar_lea.sflag [#allocation4], 1
    %375 = vsyncpa %s374, 1

</llo_original>
